<compile_context>
chip_gen: v7x
topology: tpu7x:2x2x1
jax: 0.10.0
libtpu: 0.0.40
codegen_flags: <defaults>
</compile_context>

<pallas_src>
import math
from functools import partial

import jax
import jax.numpy as jnp
from jax.experimental import pallas as pl
from jax.experimental.pallas import tpu as pltpu


def _gelu_exact(v):
    # PyTorch nn.GELU() default is the exact erf-based GELU.
    return 0.5 * v * (1.0 + jax.lax.erf(v * (1.0 / math.sqrt(2.0))))


def mlp_kernel(x_ref, w1p_ref, w2_ref, w3_ref, w4_ref, w5_ref, bp_ref, b5_ref,
               o_ref):
    xt = x_ref[...]                                   # (3, tb)
    w1p = w1p_ref[...]                                # (128, 4): w1 cols 0..2, b1 in col 3
    bp = bp_ref[...]                                  # (128, 3): padded b2, b3, b4 columns

    # Layer 1 (K=3): three VPU broadcast-FMAs instead of an MXU matmul.
    # (128,1) * (1,tb) broadcasts -> (128, tb), exact f32.
    h = (w1p[:, 0:1] * xt[0:1, :]
         + w1p[:, 1:2] * xt[1:2, :]
         + w1p[:, 2:3] * xt[2:3, :]
         + w1p[:, 3:4])                               # (128, tb)
    h = _gelu_exact(h)

    # Layers 2-4 on the MXU; activations stay lane-dense (features, tb).
    h = _gelu_exact(jnp.dot(w2_ref[...], h,
                            preferred_element_type=jnp.float32)
                    + bp[:64, 0:1])                   # (64, tb)
    h = _gelu_exact(jnp.dot(w3_ref[...], h,
                            preferred_element_type=jnp.float32)
                    + bp[:32, 1:2])                   # (32, tb)
    h = _gelu_exact(jnp.dot(w4_ref[...], h,
                            preferred_element_type=jnp.float32)
                    + bp[:16, 2:3])                   # (16, tb)

    # Layer 5: (1,16)@(16,tb) -> lane-dense (1, tb); bias is an SMEM scalar.
    o_ref[...] = (jnp.dot(w5_ref[...], h,
                          preferred_element_type=jnp.float32)
                  + b5_ref[0])                        # (1, tb)


def mlp_forward(x, params, *, tb=None, target_grid=2):
    """x: (B, 3) float32.  params: PyTorch layout [(W (out,in), b (out,))].

    tb=None auto-picks the batch tile so the grid has `target_grid` steps
    (default 2: one per v7x TensorCore; minimum overhead on v5e/v6e too),
    rounded up to a multiple of 128 lanes.
    """
    B, F = x.shape
    assert F == 3

    if tb is None:
        tb = max(128, ((pl.cdiv(B, target_grid) + 127) // 128) * 128)
    nblk = pl.cdiv(B, tb)
    Bp = nblk * tb

    (w1, b1), (w2, b2), (w3, b3), (w4, b4), (w5, b5) = params

    # Batch-on-lanes layout: (3, Bp); pad batch up to a tile multiple.
    x_t = x.T
    if Bp != B:
        x_t = jnp.pad(x_t, ((0, 0), (0, Bp - B)))

    # Pack layer-1 params into one resident (128, 4) array: [w1c0|w1c1|w1c2|b1].
    w1p = jnp.concatenate([w1, b1.reshape(-1, 1)], axis=1)          # (128, 4)
    # Pack b2/b3/b4 (zero-padded to 128 rows) into one resident (128, 3) array.
    bp = jnp.stack([
        jnp.pad(b2, (0, 128 - b2.shape[0])),
        jnp.pad(b3, (0, 128 - b3.shape[0])),
        jnp.pad(b4, (0, 128 - b4.shape[0])),
    ], axis=1)                                                      # (128, 3)
    b5s = b5.reshape(1,)                                            # scalar -> SMEM

    inputs = (x_t, w1p, w2, w3, w4, w5, bp, b5s)

    def resident(arr):
        # Whole array, constant index map -> DMA'd once, stays VMEM-resident.
        return pl.BlockSpec(arr.shape, lambda i: (0, 0))

    in_specs = [pl.BlockSpec((3, tb), lambda i: (0, i))]
    in_specs += [resident(a) for a in (w1p, w2, w3, w4, w5, bp)]
    in_specs += [pl.BlockSpec(memory_space=pltpu.MemorySpace.SMEM)]  # b5 scalar

    out_t = pl.pallas_call(
        mlp_kernel,
        out_shape=jax.ShapeDtypeStruct((1, Bp), jnp.float32),
        grid_spec=pltpu.PrefetchScalarGridSpec(
            num_scalar_prefetch=0,
            grid=(nblk,),
            in_specs=in_specs,
            out_specs=pl.BlockSpec((1, tb), lambda i: (0, i)),
        ),
        compiler_params=pltpu.CompilerParams(
            dimension_semantics=("parallel",),
        ),
    )(*inputs)

    return out_t[:, :B].T                                            # (B, 1)


def init_params(key):
    """Deterministic init mimicking nn.Linear defaults (uniform +/- 1/sqrt(fan_in)).
    Returns PyTorch-layout params: W shaped (out, in), b shaped (out,)."""
    dims = [(3, 128), (128, 64), (64, 32), (32, 16), (16, 1)]
    params = []
    for (fan_in, fan_out) in dims:
        key, kw, kb = jax.random.split(key, 3)
        bound = 1.0 / math.sqrt(fan_in)
        w = jax.random.uniform(kw, (fan_out, fan_in), jnp.float32,
                               minval=-bound, maxval=bound)
        b = jax.random.uniform(kb, (fan_out,), jnp.float32,
                               minval=-bound, maxval=bound)
        params.append((w, b))
    return params


def mlp_reference(x, params):
    """Pure-JAX reference (y = x @ W.T + b, exact erf GELU).

    Layer 1 is written in its exact-f32 elementwise form (mathematically
    identical to x @ W1.T + b1), mirroring the kernel's VPU-FMA path; layers
    2-5 use f32 jnp.dot like the kernel's MXU dots."""
    (w1, b1) = params[0]
    h = (x[:, 0:1] * w1[:, 0][None, :]
         + x[:, 1:2] * w1[:, 1][None, :]
         + x[:, 2:3] * w1[:, 2][None, :]) + b1[None, :]
    h = _gelu_exact(h)
    n = len(params)
    for idx in range(1, n):
        w, b = params[idx]
        h = jnp.dot(h, w.T, preferred_element_type=jnp.float32) + b[None, :]
        if idx < n - 1:
            h = _gelu_exact(h)
    return h


if __name__ == "__main__":
    key = jax.random.PRNGKey(0)
    kx, kp = jax.random.split(key)

    # Small example shape: B=256 -> auto tb=128, grid=(2,): one step per v7x
    # TensorCore, minimum per-step overhead everywhere else.
    B = 256
    x1 = jax.random.uniform(jax.random.fold_in(kx, 0), (B, 1), minval=0.0, maxval=1.0)
    x2 = jax.random.uniform(jax.random.fold_in(kx, 1), (B, 1), minval=0.0, maxval=10.0)
    x3 = jax.random.uniform(jax.random.fold_in(kx, 2), (B, 1), minval=0.0, maxval=100.0)
    x = jnp.concatenate([x1, x2, x3], axis=1).astype(jnp.float32)

    params = init_params(kp)

    # jit the wrapper so the transpose/pad/slice layout plumbing fuses with the
    # surrounding graph instead of being standalone copies around a us kernel.
    fwd = jax.jit(partial(mlp_forward))
    out = jax.block_until_ready(fwd(x, params))

    ref = mlp_reference(x, params)
    assert out.shape == (B, 1)
    max_err = float(jnp.max(jnp.abs(out - ref)))
    assert jnp.allclose(out, ref, atol=1e-3, rtol=1e-3), \
        f"mismatch vs reference (max abs err {max_err})"

    print("KERNEL_OK")
</pallas_src>

<mosaic_0001>
module attributes {stable_mosaic.version = 11 : i64} {
  func.func @mlp_kernel(%arg0: i32, %arg1: memref<3x128xf32, #tpu.memory_space<vmem>>, %arg2: memref<128x4xf32, #tpu.memory_space<vmem>>, %arg3: memref<64x128xf32, #tpu.memory_space<vmem>>, %arg4: memref<32x64xf32, #tpu.memory_space<vmem>>, %arg5: memref<16x32xf32, #tpu.memory_space<vmem>>, %arg6: memref<1x16xf32, #tpu.memory_space<vmem>>, %arg7: memref<128x3xf32, #tpu.memory_space<vmem>>, %arg8: memref<1xf32, #tpu.memory_space<smem>>, %arg9: memref<1x128xf32, #tpu.memory_space<vmem>>) attributes {dimension_semantics = [#tpu.dimension_semantics<parallel>], iteration_bounds = array<i64: 2>, scalar_prefetch = 0 : i64, scratch_operands = 0 : i64, tpu.core_type = #tpu.core_type<tc>, window_params = [{transform_indices = @transform_0, window_bounds = array<i64: 3, 128>}, {pipeline_mode = #tpu.pipeline_mode<synchronous>, transform_indices = @transform_1, window_bounds = array<i64: 128, 4>}, {pipeline_mode = #tpu.pipeline_mode<synchronous>, transform_indices = @transform_2, window_bounds = array<i64: 64, 128>}, {pipeline_mode = #tpu.pipeline_mode<synchronous>, transform_indices = @transform_3, window_bounds = array<i64: 32, 64>}, {pipeline_mode = #tpu.pipeline_mode<synchronous>, transform_indices = @transform_4, window_bounds = array<i64: 16, 32>}, {pipeline_mode = #tpu.pipeline_mode<synchronous>, transform_indices = @transform_5, window_bounds = array<i64: 1, 16>}, {pipeline_mode = #tpu.pipeline_mode<synchronous>, transform_indices = @transform_6, window_bounds = array<i64: 128, 3>}, {transform_indices = @transform_7, window_bounds = array<i64: 1>}, {transform_indices = @transform_8, window_bounds = array<i64: 1, 128>}]} {
    %c0 = arith.constant 0 : index
    %c0_0 = arith.constant 0 : index
    %0 = vector.load %arg1[%c0, %c0_0] : memref<3x128xf32, #tpu.memory_space<vmem>>, vector<3x128xf32>
    %c0_1 = arith.constant 0 : index
    %c0_2 = arith.constant 0 : index
    %1 = vector.load %arg2[%c0_1, %c0_2] : memref<128x4xf32, #tpu.memory_space<vmem>>, vector<128x4xf32>
    %c0_3 = arith.constant 0 : index
    %c0_4 = arith.constant 0 : index
    %2 = vector.load %arg7[%c0_3, %c0_4] : memref<128x3xf32, #tpu.memory_space<vmem>>, vector<128x3xf32>
    %3 = vector.extract_strided_slice %1 {offsets = [0, 0], sizes = [128, 1], strides = [1, 1]} : vector<128x4xf32> to vector<128x1xf32>
    %4 = vector.extract_strided_slice %0 {offsets = [0, 0], sizes = [1, 128], strides = [1, 1]} : vector<3x128xf32> to vector<1x128xf32>
    %5 = vector.broadcast %3 : vector<128x1xf32> to vector<128x128xf32>
    %6 = vector.broadcast %4 : vector<1x128xf32> to vector<128x128xf32>
    %7 = arith.mulf %5, %6 : vector<128x128xf32>
    %8 = vector.extract_strided_slice %1 {offsets = [0, 1], sizes = [128, 1], strides = [1, 1]} : vector<128x4xf32> to vector<128x1xf32>
    %9 = vector.extract_strided_slice %0 {offsets = [1, 0], sizes = [1, 128], strides = [1, 1]} : vector<3x128xf32> to vector<1x128xf32>
    %10 = vector.broadcast %8 : vector<128x1xf32> to vector<128x128xf32>
    %11 = vector.broadcast %9 : vector<1x128xf32> to vector<128x128xf32>
    %12 = arith.mulf %10, %11 : vector<128x128xf32>
    %13 = arith.addf %7, %12 : vector<128x128xf32>
    %14 = vector.extract_strided_slice %1 {offsets = [0, 2], sizes = [128, 1], strides = [1, 1]} : vector<128x4xf32> to vector<128x1xf32>
    %15 = vector.extract_strided_slice %0 {offsets = [2, 0], sizes = [1, 128], strides = [1, 1]} : vector<3x128xf32> to vector<1x128xf32>
    %16 = vector.broadcast %14 : vector<128x1xf32> to vector<128x128xf32>
    %17 = vector.broadcast %15 : vector<1x128xf32> to vector<128x128xf32>
    %18 = arith.mulf %16, %17 : vector<128x128xf32>
    %19 = arith.addf %13, %18 : vector<128x128xf32>
    %20 = vector.extract_strided_slice %1 {offsets = [0, 3], sizes = [128, 1], strides = [1, 1]} : vector<128x4xf32> to vector<128x1xf32>
    %21 = vector.broadcast %20 : vector<128x1xf32> to vector<128x128xf32>
    %22 = arith.addf %19, %21 : vector<128x128xf32>
    %cst = arith.constant 5.000000e-01 : f32
    %23 = vector.broadcast %cst : f32 to vector<128x128xf32>
    %24 = arith.mulf %23, %22 : vector<128x128xf32>
    %cst_5 = arith.constant 0.707106769 : f32
    %25 = vector.broadcast %cst_5 : f32 to vector<128x128xf32>
    %26 = arith.mulf %22, %25 : vector<128x128xf32>
    %27 = math.erf %26 : vector<128x128xf32>
    %cst_6 = arith.constant 1.000000e+00 : f32
    %28 = vector.broadcast %cst_6 : f32 to vector<128x128xf32>
    %29 = arith.addf %28, %27 : vector<128x128xf32>
    %30 = arith.mulf %24, %29 : vector<128x128xf32>
    %c0_7 = arith.constant 0 : index
    %c0_8 = arith.constant 0 : index
    %31 = vector.load %arg3[%c0_7, %c0_8] : memref<64x128xf32, #tpu.memory_space<vmem>>, vector<64x128xf32>
    %cst_9 = arith.constant dense<0.000000e+00> : vector<64x128xf32>
    %32 = tpu.matmul %31, %30, %cst_9 {dimension_numbers = #tpu.dot_dimension_numbers<[1], [0], [0], [1], [0, 0, 1, 1], [], []>} : vector<64x128xf32>, vector<128x128xf32>, vector<64x128xf32> -> vector<64x128xf32>
    %33 = vector.extract_strided_slice %2 {offsets = [0, 0], sizes = [64, 1], strides = [1, 1]} : vector<128x3xf32> to vector<64x1xf32>
    %34 = vector.broadcast %33 : vector<64x1xf32> to vector<64x128xf32>
    %35 = arith.addf %32, %34 : vector<64x128xf32>
    %cst_10 = arith.constant 5.000000e-01 : f32
    %36 = vector.broadcast %cst_10 : f32 to vector<64x128xf32>
    %37 = arith.mulf %36, %35 : vector<64x128xf32>
    %cst_11 = arith.constant 0.707106769 : f32
    %38 = vector.broadcast %cst_11 : f32 to vector<64x128xf32>
    %39 = arith.mulf %35, %38 : vector<64x128xf32>
    %40 = math.erf %39 : vector<64x128xf32>
    %cst_12 = arith.constant 1.000000e+00 : f32
    %41 = vector.broadcast %cst_12 : f32 to vector<64x128xf32>
    %42 = arith.addf %41, %40 : vector<64x128xf32>
    %43 = arith.mulf %37, %42 : vector<64x128xf32>
    %c0_13 = arith.constant 0 : index
    %c0_14 = arith.constant 0 : index
    %44 = vector.load %arg4[%c0_13, %c0_14] : memref<32x64xf32, #tpu.memory_space<vmem>>, vector<32x64xf32>
    %cst_15 = arith.constant dense<0.000000e+00> : vector<32x128xf32>
    %45 = tpu.matmul %44, %43, %cst_15 {dimension_numbers = #tpu.dot_dimension_numbers<[1], [0], [0], [1], [0, 0, 1, 1], [], []>} : vector<32x64xf32>, vector<64x128xf32>, vector<32x128xf32> -> vector<32x128xf32>
    %46 = vector.extract_strided_slice %2 {offsets = [0, 1], sizes = [32, 1], strides = [1, 1]} : vector<128x3xf32> to vector<32x1xf32>
    %47 = vector.broadcast %46 : vector<32x1xf32> to vector<32x128xf32>
    %48 = arith.addf %45, %47 : vector<32x128xf32>
    %cst_16 = arith.constant 5.000000e-01 : f32
    %49 = vector.broadcast %cst_16 : f32 to vector<32x128xf32>
    %50 = arith.mulf %49, %48 : vector<32x128xf32>
    %cst_17 = arith.constant 0.707106769 : f32
    %51 = vector.broadcast %cst_17 : f32 to vector<32x128xf32>
    %52 = arith.mulf %48, %51 : vector<32x128xf32>
    %53 = math.erf %52 : vector<32x128xf32>
    %cst_18 = arith.constant 1.000000e+00 : f32
    %54 = vector.broadcast %cst_18 : f32 to vector<32x128xf32>
    %55 = arith.addf %54, %53 : vector<32x128xf32>
    %56 = arith.mulf %50, %55 : vector<32x128xf32>
    %c0_19 = arith.constant 0 : index
    %c0_20 = arith.constant 0 : index
    %57 = vector.load %arg5[%c0_19, %c0_20] : memref<16x32xf32, #tpu.memory_space<vmem>>, vector<16x32xf32>
    %cst_21 = arith.constant dense<0.000000e+00> : vector<16x128xf32>
    %58 = tpu.matmul %57, %56, %cst_21 {dimension_numbers = #tpu.dot_dimension_numbers<[1], [0], [0], [1], [0, 0, 1, 1], [], []>} : vector<16x32xf32>, vector<32x128xf32>, vector<16x128xf32> -> vector<16x128xf32>
    %59 = vector.extract_strided_slice %2 {offsets = [0, 2], sizes = [16, 1], strides = [1, 1]} : vector<128x3xf32> to vector<16x1xf32>
    %60 = vector.broadcast %59 : vector<16x1xf32> to vector<16x128xf32>
    %61 = arith.addf %58, %60 : vector<16x128xf32>
    %cst_22 = arith.constant 5.000000e-01 : f32
    %62 = vector.broadcast %cst_22 : f32 to vector<16x128xf32>
    %63 = arith.mulf %62, %61 : vector<16x128xf32>
    %cst_23 = arith.constant 0.707106769 : f32
    %64 = vector.broadcast %cst_23 : f32 to vector<16x128xf32>
    %65 = arith.mulf %61, %64 : vector<16x128xf32>
    %66 = math.erf %65 : vector<16x128xf32>
    %cst_24 = arith.constant 1.000000e+00 : f32
    %67 = vector.broadcast %cst_24 : f32 to vector<16x128xf32>
    %68 = arith.addf %67, %66 : vector<16x128xf32>
    %69 = arith.mulf %63, %68 : vector<16x128xf32>
    %c0_25 = arith.constant 0 : index
    %c0_26 = arith.constant 0 : index
    %70 = vector.load %arg6[%c0_25, %c0_26] : memref<1x16xf32, #tpu.memory_space<vmem>>, vector<1x16xf32>
    %cst_27 = arith.constant dense<0.000000e+00> : vector<1x128xf32>
    %71 = tpu.matmul %70, %69, %cst_27 {dimension_numbers = #tpu.dot_dimension_numbers<[1], [0], [0], [1], [0, 0, 1, 1], [], []>} : vector<1x16xf32>, vector<16x128xf32>, vector<1x128xf32> -> vector<1x128xf32>
    %c0_28 = arith.constant 0 : index
    %72 = memref.load %arg8[%c0_28] : memref<1xf32, #tpu.memory_space<smem>>
    %73 = vector.broadcast %72 : f32 to vector<1x128xf32>
    %74 = arith.addf %71, %73 : vector<1x128xf32>
    %c0_29 = arith.constant 0 : index
    %c0_30 = arith.constant 0 : index
    %75 = vector.load %arg9[%c0_29, %c0_30] : memref<1x128xf32, #tpu.memory_space<vmem>>, vector<1x128xf32>
    tpu.vector_store %arg9[%c0_29, %c0_30], %74 {strides = array<i32>} : memref<1x128xf32, #tpu.memory_space<vmem>>, vector<1x128xf32>,
    return
  }
  func.func @transform_0(%arg0: i32) -> (i32, i32) {
    %c0_i32 = arith.constant 0 : i32
    %c0_i32_0 = arith.constant 0 : i32
    return %c0_i32, %arg0 : i32, i32
  }
  func.func @transform_1(%arg0: i32) -> (i32, i32) {
    %c0_i32 = arith.constant 0 : i32
    %c0_i32_0 = arith.constant 0 : i32
    %c0_i32_1 = arith.constant 0 : i32
    return %c0_i32, %c0_i32_0 : i32, i32
  }
  func.func @transform_2(%arg0: i32) -> (i32, i32) {
    %c0_i32 = arith.constant 0 : i32
    %c0_i32_0 = arith.constant 0 : i32
    %c0_i32_1 = arith.constant 0 : i32
    return %c0_i32, %c0_i32_0 : i32, i32
  }
  func.func @transform_3(%arg0: i32) -> (i32, i32) {
    %c0_i32 = arith.constant 0 : i32
    %c0_i32_0 = arith.constant 0 : i32
    %c0_i32_1 = arith.constant 0 : i32
    return %c0_i32, %c0_i32_0 : i32, i32
  }
  func.func @transform_4(%arg0: i32) -> (i32, i32) {
    %c0_i32 = arith.constant 0 : i32
    %c0_i32_0 = arith.constant 0 : i32
    %c0_i32_1 = arith.constant 0 : i32
    return %c0_i32, %c0_i32_0 : i32, i32
  }
  func.func @transform_5(%arg0: i32) -> (i32, i32) {
    %c0_i32 = arith.constant 0 : i32
    %c0_i32_0 = arith.constant 0 : i32
    %c0_i32_1 = arith.constant 0 : i32
    return %c0_i32, %c0_i32_0 : i32, i32
  }
  func.func @transform_6(%arg0: i32) -> (i32, i32) {
    %c0_i32 = arith.constant 0 : i32
    %c0_i32_0 = arith.constant 0 : i32
    %c0_i32_1 = arith.constant 0 : i32
    return %c0_i32, %c0_i32_0 : i32, i32
  }
  func.func @transform_7(%arg0: i32) -> i32 {
    %c0_i32 = arith.constant 0 : i32
    %c0_i32_0 = arith.constant 0 : i32
    return %c0_i32 : i32
  }
  func.func @transform_8(%arg0: i32) -> (i32, i32) {
    %c0_i32 = arith.constant 0 : i32
    %c0_i32_0 = arith.constant 0 : i32
    return %c0_i32, %arg0 : i32, i32
  }
}

</mosaic_0001>

<llo_original>
// kernel: mlp_forward.1
$region0: #{mlp_forward.1}
  #allocation0 [shape = 'u32[]', space=smem, size = 0x4, offset = 0x4, fixed_abs, tag = 'smem constant byte address 0x4 - core index']
  #allocation1 [shape = 'u32[144,128]{1,0:T(1,128)}', space=vmem, size = 0x12000, scoped, tag = 'internal scratch']
  #allocation2 [shape = 'f32[1]{0:T(128)S(6)}', space=smem, size = 0x200, scoped, tag = 'scoped memory for mlp_forward.1']
  %s0 = inlined_call_operand.vmem [shape: f32[3,256], index: 0, kind: input, shape index: {}]
  %s1 = inlined_call_operand.vmem [shape: f32[128,4], index: 1, kind: input, shape index: {}]
  %s2 = inlined_call_operand.vmem [shape: f32[64,128], index: 2, kind: input, shape index: {}]
  %s3 = inlined_call_operand.vmem [shape: f32[32,64], index: 3, kind: input, shape index: {}]
  %s4 = inlined_call_operand.vmem [shape: f32[16,32], index: 4, kind: input, shape index: {}]
  %s5 = inlined_call_operand.vmem [shape: f32[1,16], index: 5, kind: input, shape index: {}]
  %s6 = inlined_call_operand.vmem [shape: f32[128,3], index: 6, kind: input, shape index: {}]
  %s7 = inlined_call_operand.<no memory space> [shape: f32[1], index: 7, kind: input, shape index: {}]
  %s8 = inlined_call_operand.hbm [shape: f32[1,256], index: 8, kind: output, shape index: {}]
  %s9 = sld [smem:[#allocation0]]
  $region65: #{mlp_forward.1} parent=0
    _
  %s11 = ssub.s32 1, %s9
  %s12 = scalar_select 0, %s11, %s9
  %13 = sst [smem:[#allocation2]] %s7
  $region1: #{mlp_forward.1} parent=0
    #allocation3 [shape = 'u8[1024]{0}', space=vmem, size = 0x400, scoped, tag = 'output window, operand 0']
    #allocation4 [shape = 's32[2]{0}', space=sflag, size = 0x8, scoped, tag = 'scoped memory for mlp_forward.1']
    %14 = vsyncpa [#allocation4], 0
    %s15 = scalar_lea.sflag [#allocation4], 1
    %16 = vsyncpa %s15, 0
    loop: start=0, step=1, limit=4
    $region2: #{mlp_forward.1} parent=1 // loop_pre_header
      _
    $region3: #{mlp_forward.1} parent=1 // loop_header
      %s18 = sphi 0, %s22
      %p19 = scmp.ge.s32.totalorder %s18, 4
      %s28 = sphi 0, %s30
      %s31 = sphi 0, %s28
      %s32 = sphi 0, %s31
      %s48 = sphi 0, %s32
      %s52 = sphi 0, %s52
      %s54 = sphi 0, %s52
      %s55 = sphi 0, %s54
      %s69 = sphi 0, %s55
      %s73 = sphi 0, %s73
      %s75 = sphi 0, %s73
      %s76 = sphi 0, %s75
      %s90 = sphi 0, %s76
      %s94 = sphi 0, %s94
      %s96 = sphi 0, %s94
      %s97 = sphi 0, %s96
      %s111 = sphi 0, %s97
      %s115 = sphi 0, %s115
      %s117 = sphi 0, %s115
      %s118 = sphi 0, %s117
      %s132 = sphi 0, %s118
      %s136 = sphi 0, %s136
      %s138 = sphi 0, %s136
      %s139 = sphi 0, %s138
      %s153 = sphi 0, %s139
      %s157 = sphi 0, %s157
      %s159 = sphi 0, %s157
      %s160 = sphi 0, %s159
      %s174 = sphi 0, %s160
      %s178 = sphi 0, %s178
      %s180 = sphi 0, %s178
      %s181 = sphi 0, %s180
      %s195 = sphi 0, %s181
      %s201 = sphi 0, %s203
      %s204 = sphi 0, %s201
      %s205 = sphi 0, %s204
      %s221 = sphi 0, %s205
    $region4: #{mlp_forward.1} parent=1 // loop_header_branch
      %21 = sbr.rel (%p19) target = $region8
    $region5: #{mlp_forward.1} parent=1 // loop_body
      %s23 = ssub.s32 %s18, 1
      %s24 = ssub.s32 %s18, 2
      %s25 = sadd.s32 %s18, 1
      %s26 = ssub.s32 %s18, %s25
      %p27 = scmp.eq.s32.totalorder %s26, 0
      %s29 = sadd.s32 %s28, 1
      %s30 = scalar_select %p27, %s28, %s29
      %p33 = pneg %p27
      %p34 = scmp.eq.s32.totalorder %s18, 1
      %p35 = por %p33, %p34
      %p36 = scmp.ne.s32.totalorder %s28, %s31
      %p37 = scmp.eq.s32.totalorder %s18, 0
      %p38 = por %p36, %p37
      %p39 = scmp.ne.s32.totalorder %s28, %s31
      %p40 = scmp.eq.s32.totalorder %s23, 1
      %p41 = por %p39, %p40
      %p42 = scmp.ne.s32.totalorder %s31, %s32
      %p43 = scmp.eq.s32.totalorder %s23, 0
      %p44 = por %p42, %p43
      %p45 = scmp.ne.s32.totalorder %s31, %s32
      %p46 = scmp.eq.s32.totalorder %s24, 1
      %p47 = por %p45, %p46
      %p49 = scmp.ne.s32.totalorder %s32, %s48
      %p50 = scmp.eq.s32.totalorder %s24, 0
      %p51 = por %p49, %p50
      %s53 = sadd.s32 %s52, 1
      %p56 = scmp.eq.s32.totalorder %s18, 1
      %p57 = scmp.ne.s32.totalorder %s52, %s54
      %p58 = scmp.eq.s32.totalorder %s18, 0
      %p59 = por %p57, %p58
      %p60 = scmp.ne.s32.totalorder %s52, %s54
      %p61 = scmp.eq.s32.totalorder %s23, 1
      %p62 = por %p60, %p61
      %p63 = scmp.ne.s32.totalorder %s54, %s55
      %p64 = scmp.eq.s32.totalorder %s23, 0
      %p65 = por %p63, %p64
      %p66 = scmp.ne.s32.totalorder %s54, %s55
      %p67 = scmp.eq.s32.totalorder %s24, 1
      %p68 = por %p66, %p67
      %p70 = scmp.ne.s32.totalorder %s55, %s69
      %p71 = scmp.eq.s32.totalorder %s24, 0
      %p72 = por %p70, %p71
      %s74 = sadd.s32 %s73, 1
      %p77 = scmp.eq.s32.totalorder %s18, 1
      %p78 = scmp.ne.s32.totalorder %s73, %s75
      %p79 = scmp.eq.s32.totalorder %s18, 0
      %p80 = por %p78, %p79
      %p81 = scmp.ne.s32.totalorder %s73, %s75
      %p82 = scmp.eq.s32.totalorder %s23, 1
      %p83 = por %p81, %p82
      %p84 = scmp.ne.s32.totalorder %s75, %s76
      %p85 = scmp.eq.s32.totalorder %s23, 0
      %p86 = por %p84, %p85
      %p87 = scmp.ne.s32.totalorder %s75, %s76
      %p88 = scmp.eq.s32.totalorder %s24, 1
      %p89 = por %p87, %p88
      %p91 = scmp.ne.s32.totalorder %s76, %s90
      %p92 = scmp.eq.s32.totalorder %s24, 0
      %p93 = por %p91, %p92
      %s95 = sadd.s32 %s94, 1
      %p98 = scmp.eq.s32.totalorder %s18, 1
      %p99 = scmp.ne.s32.totalorder %s94, %s96
      %p100 = scmp.eq.s32.totalorder %s18, 0
      %p101 = por %p99, %p100
      %p102 = scmp.ne.s32.totalorder %s94, %s96
      %p103 = scmp.eq.s32.totalorder %s23, 1
      %p104 = por %p102, %p103
      %p105 = scmp.ne.s32.totalorder %s96, %s97
      %p106 = scmp.eq.s32.totalorder %s23, 0
      %p107 = por %p105, %p106
      %p108 = scmp.ne.s32.totalorder %s96, %s97
      %p109 = scmp.eq.s32.totalorder %s24, 1
      %p110 = por %p108, %p109
      %p112 = scmp.ne.s32.totalorder %s97, %s111
      %p113 = scmp.eq.s32.totalorder %s24, 0
      %p114 = por %p112, %p113
      %s116 = sadd.s32 %s115, 1
      %p119 = scmp.eq.s32.totalorder %s18, 1
      %p120 = scmp.ne.s32.totalorder %s115, %s117
      %p121 = scmp.eq.s32.totalorder %s18, 0
      %p122 = por %p120, %p121
      %p123 = scmp.ne.s32.totalorder %s115, %s117
      %p124 = scmp.eq.s32.totalorder %s23, 1
      %p125 = por %p123, %p124
      %p126 = scmp.ne.s32.totalorder %s117, %s118
      %p127 = scmp.eq.s32.totalorder %s23, 0
      %p128 = por %p126, %p127
      %p129 = scmp.ne.s32.totalorder %s117, %s118
      %p130 = scmp.eq.s32.totalorder %s24, 1
      %p131 = por %p129, %p130
      %p133 = scmp.ne.s32.totalorder %s118, %s132
      %p134 = scmp.eq.s32.totalorder %s24, 0
      %p135 = por %p133, %p134
      %s137 = sadd.s32 %s136, 1
      %p140 = scmp.eq.s32.totalorder %s18, 1
      %p141 = scmp.ne.s32.totalorder %s136, %s138
      %p142 = scmp.eq.s32.totalorder %s18, 0
      %p143 = por %p141, %p142
      %p144 = scmp.ne.s32.totalorder %s136, %s138
      %p145 = scmp.eq.s32.totalorder %s23, 1
      %p146 = por %p144, %p145
      %p147 = scmp.ne.s32.totalorder %s138, %s139
      %p148 = scmp.eq.s32.totalorder %s23, 0
      %p149 = por %p147, %p148
      %p150 = scmp.ne.s32.totalorder %s138, %s139
      %p151 = scmp.eq.s32.totalorder %s24, 1
      %p152 = por %p150, %p151
      %p154 = scmp.ne.s32.totalorder %s139, %s153
      %p155 = scmp.eq.s32.totalorder %s24, 0
      %p156 = por %p154, %p155
      %s158 = sadd.s32 %s157, 1
      %p161 = scmp.eq.s32.totalorder %s18, 1
      %p162 = scmp.ne.s32.totalorder %s157, %s159
      %p163 = scmp.eq.s32.totalorder %s18, 0
      %p164 = por %p162, %p163
      %p165 = scmp.ne.s32.totalorder %s157, %s159
      %p166 = scmp.eq.s32.totalorder %s23, 1
      %p167 = por %p165, %p166
      %p168 = scmp.ne.s32.totalorder %s159, %s160
      %p169 = scmp.eq.s32.totalorder %s23, 0
      %p170 = por %p168, %p169
      %p171 = scmp.ne.s32.totalorder %s159, %s160
      %p172 = scmp.eq.s32.totalorder %s24, 1
      %p173 = por %p171, %p172
      %p175 = scmp.ne.s32.totalorder %s160, %s174
      %p176 = scmp.eq.s32.totalorder %s24, 0
      %p177 = por %p175, %p176
      %s179 = sadd.s32 %s178, 1
      %p182 = scmp.eq.s32.totalorder %s18, 1
      %p183 = scmp.ne.s32.totalorder %s178, %s180
      %p184 = scmp.eq.s32.totalorder %s18, 0
      %p185 = por %p183, %p184
      %p186 = scmp.ne.s32.totalorder %s178, %s180
      %p187 = scmp.eq.s32.totalorder %s23, 1
      %p188 = por %p186, %p187
      %p189 = scmp.ne.s32.totalorder %s180, %s181
      %p190 = scmp.eq.s32.totalorder %s23, 0
      %p191 = por %p189, %p190
      %p192 = scmp.ne.s32.totalorder %s180, %s181
      %p193 = scmp.eq.s32.totalorder %s24, 1
      %p194 = por %p192, %p193
      %p196 = scmp.ne.s32.totalorder %s181, %s195
      %p197 = scmp.eq.s32.totalorder %s24, 0
      %p198 = por %p196, %p197
      %s199 = ssub.s32 %s18, %s25
      %p200 = scmp.eq.s32.totalorder %s199, 0
      %s202 = sadd.s32 %s201, 1
      %s203 = scalar_select %p200, %s201, %s202
      %p206 = pneg %p200
      %p207 = scmp.eq.s32.totalorder %s18, 1
      %p208 = por %p206, %p207
      %p209 = scmp.ne.s32.totalorder %s201, %s204
      %p210 = scmp.eq.s32.totalorder %s18, 0
      %p211 = por %p209, %p210
      %p212 = scmp.ne.s32.totalorder %s201, %s204
      %p213 = scmp.eq.s32.totalorder %s23, 1
      %p214 = por %p212, %p213
      %p215 = scmp.ne.s32.totalorder %s204, %s205
      %p216 = scmp.eq.s32.totalorder %s23, 0
      %p217 = por %p215, %p216
      %p218 = scmp.ne.s32.totalorder %s204, %s205
      %p219 = scmp.eq.s32.totalorder %s24, 1
      %p220 = por %p218, %p219
      %p222 = scmp.ne.s32.totalorder %s205, %s221
      %p223 = scmp.eq.s32.totalorder %s24, 0
      %p224 = por %p222, %p223
      %p225 = scmp.le.s32.totalorder 1, %s18
      %p226 = scmp.lt.s32.totalorder %s18, 3
      %p227 = pnand %p225, %p226
      %p228 = pneg %p227
      // Predicated region
      $region9: #{mlp_forward.1} parent=5 // pred_check
        _
      $region10: #{mlp_forward.1} parent=5 // pred_check_branch
        %230 = sbr.rel (%p227) target = $region12
      $region11: #{mlp_forward.1} parent=5 // pred_region
        %s231 = ssub.s32 %s18, 1
        // Predicated region
        $region13: #{mlp_forward.1} parent=11 // pred_check
          %p232 = pneg %p65
        $region14: #{mlp_forward.1} parent=11 // pred_check_branch
          %234 = sbr.rel (%p232) target = $region16
        $region15: #{mlp_forward.1} parent=11 // pred_region
          _
        $region16: #{mlp_forward.1} parent=11 // pred_fallthru
          _
        // Predicated region
        $region17: #{mlp_forward.1} parent=11 // pred_check
          %p235 = pneg %p86
        $region18: #{mlp_forward.1} parent=11 // pred_check_branch
          %237 = sbr.rel (%p235) target = $region20
        $region19: #{mlp_forward.1} parent=11 // pred_region
          _
        $region20: #{mlp_forward.1} parent=11 // pred_fallthru
          _
        // Predicated region
        $region21: #{mlp_forward.1} parent=11 // pred_check
          %p238 = pneg %p107
        $region22: #{mlp_forward.1} parent=11 // pred_check_branch
          %240 = sbr.rel (%p238) target = $region24
        $region23: #{mlp_forward.1} parent=11 // pred_region
          _
        $region24: #{mlp_forward.1} parent=11 // pred_fallthru
          _
        // Predicated region
        $region25: #{mlp_forward.1} parent=11 // pred_check
          %p241 = pneg %p128
        $region26: #{mlp_forward.1} parent=11 // pred_check_branch
          %243 = sbr.rel (%p241) target = $region28
        $region27: #{mlp_forward.1} parent=11 // pred_region
          _
        $region28: #{mlp_forward.1} parent=11 // pred_fallthru
          _
        // Predicated region
        $region29: #{mlp_forward.1} parent=11 // pred_check
          %p244 = pneg %p149
        $region30: #{mlp_forward.1} parent=11 // pred_check_branch
          %246 = sbr.rel (%p244) target = $region32
        $region31: #{mlp_forward.1} parent=11 // pred_region
          _
        $region32: #{mlp_forward.1} parent=11 // pred_fallthru
          _
        // Predicated region
        $region33: #{mlp_forward.1} parent=11 // pred_check
          %p247 = pneg %p170
        $region34: #{mlp_forward.1} parent=11 // pred_check_branch
          %249 = sbr.rel (%p247) target = $region36
        $region35: #{mlp_forward.1} parent=11 // pred_region
          _
        $region36: #{mlp_forward.1} parent=11 // pred_fallthru
          _
        // Predicated region
        $region37: #{mlp_forward.1} parent=11 // pred_check
          %p250 = pneg %p191
        $region38: #{mlp_forward.1} parent=11 // pred_check_branch
          %252 = sbr.rel (%p250) target = $region40
        $region39: #{mlp_forward.1} parent=11 // pred_region
          _
        $region40: #{mlp_forward.1} parent=11 // pred_fallthru
          _
      $region12: #{mlp_forward.1} parent=5 // pred_fallthru
        _
      %p253 = scmp.lt.s32.totalorder %s18, 2
      // Predicated region
      $region41: #{mlp_forward.1} parent=5 // pred_check
        %p254 = pneg %p253
      $region42: #{mlp_forward.1} parent=5 // pred_check_branch
        %256 = sbr.rel (%p254) target = $region44
      $region43: #{mlp_forward.1} parent=5 // pred_region
        // Predicated region
        $region45: #{mlp_forward.1} parent=43 // pred_check
          %p257 = pneg %p38
        $region46: #{mlp_forward.1} parent=43 // pred_check_branch
          %259 = sbr.rel (%p257) target = $region48
        $region47: #{mlp_forward.1} parent=43 // pred_region
          %p260 = scmp.lt.s32.totalorder %s18, 1
          %s261 = scalar_select %p260, %s18, 1
          %s262 = smul.addr %s261, 4
          %s263 = scalar_lea.vmem %s0, %s262
        $region48: #{mlp_forward.1} parent=43 // pred_fallthru
          _
      $region44: #{mlp_forward.1} parent=5 // pred_fallthru
        _
      %p264 = scmp.le.s32.totalorder 1, %s18
      %p265 = scmp.lt.s32.totalorder %s18, 3
      %p266 = pnand %p264, %p265
      %p267 = pneg %p266
      // Predicated region
      $region49: #{mlp_forward.1} parent=5 // pred_check
        _
      $region50: #{mlp_forward.1} parent=5 // pred_check_branch
        %269 = sbr.rel (%p266) target = $region52
      $region51: #{mlp_forward.1} parent=5 // pred_region
        %s270 = ssub.s32 %s18, 1
        %p271 = scmp.lt.s32.totalorder %s23, 1
        %s272 = scalar_select %p271, %s23, 1
        %s273 = smul.addr %s272, 4
        %s274 = scalar_lea.vmem %s0, %s273
        %p275 = pneg %p44
        %p276 = pneg %p41
        %p277 = pneg %p65
        %p278 = pneg %p62
        %p279 = pneg %p86
        %p280 = pneg %p83
        %p281 = pneg %p107
        %p282 = pneg %p104
        %p283 = pneg %p128
        %p284 = pneg %p125
        %p285 = pneg %p149
        %p286 = pneg %p146
        %p287 = pneg %p170
        %p288 = pneg %p167
        %p289 = pneg %p191
        %p290 = pneg %p188
        %p291 = pneg %p217
        %p292 = pneg %p214
        %s293 = sand.u32 %s204, 1
        %s294 = scalar_lea.sflag [#allocation4], %s293
        %s295 = sand.u32 %s204, 1
        %s296 = scalar_lea.vmem [#allocation3], %s295
        %p297 = scmp.lt.s32.totalorder %s23, 1
        %s298 = scalar_select %p297, %s23, 1
        %s299 = smul.addr %s298, 4
        %s300 = scalar_lea.vmem %s0, %s299
        %v301 = vld [vmem:[%s300] sm:$0x7]
        %v302 = vld [vmem:[%s1] sm:$0xff]
        %v303 = vld [vmem:[%s1 + $0x8] sm:$0xff]
        %v304 = vld [vmem:[%s1 + $0x10] sm:$0xff]
        %v305 = vld [vmem:[%s1 + $0x18] sm:$0xff]
        %v306 = vld [vmem:[%s1 + $0x20] sm:$0xff]
        %v307 = vld [vmem:[%s1 + $0x28] sm:$0xff]
        %v308 = vld [vmem:[%s1 + $0x30] sm:$0xff]
        %v309 = vld [vmem:[%s1 + $0x38] sm:$0xff]
        %v310 = vld [vmem:[%s1 + $0x40] sm:$0xff]
        %v311 = vld [vmem:[%s1 + $0x48] sm:$0xff]
        %v312 = vld [vmem:[%s1 + $0x50] sm:$0xff]
        %v313 = vld [vmem:[%s1 + $0x58] sm:$0xff]
        %v314 = vld [vmem:[%s1 + $0x60] sm:$0xff]
        %v315 = vld [vmem:[%s1 + $0x68] sm:$0xff]
        %v316 = vld [vmem:[%s1 + $0x70] sm:$0xff]
        %v317 = vld [vmem:[%s1 + $0x78] sm:$0xff]
        %v318 = vld [vmem:[%s6] sm:$0xff]
        %v319 = vld [vmem:[%s6 + $0x8] sm:$0xff]
        %v320 = vld [vmem:[%s6 + $0x10] sm:$0xff]
        %v321 = vld [vmem:[%s6 + $0x18] sm:$0xff]
        %v322 = vld [vmem:[%s6 + $0x20] sm:$0xff]
        %v323 = vld [vmem:[%s6 + $0x28] sm:$0xff]
        %v324 = vld [vmem:[%s6 + $0x30] sm:$0xff]
        %v325 = vld [vmem:[%s6 + $0x38] sm:$0xff]
        %327 = vset.pattern.permute.xlu0 0
        %328 = vperm.xlu0 %327, %v302
        %v329 = vpop.permute.xlu0 %328
        %332 = vset.pattern.permute.xlu0 0
        %333 = vperm.xlu0 %332, %v303
        %v334 = vpop.permute.xlu0 %333
        %337 = vset.pattern.permute.xlu0 0
        %338 = vperm.xlu0 %337, %v304
        %v339 = vpop.permute.xlu0 %338
        %342 = vset.pattern.permute.xlu0 0
        %343 = vperm.xlu0 %342, %v305
        %v344 = vpop.permute.xlu0 %343
        %347 = vset.pattern.permute.xlu0 0
        %348 = vperm.xlu0 %347, %v306
        %v349 = vpop.permute.xlu0 %348
        %352 = vset.pattern.permute.xlu0 0
        %353 = vperm.xlu0 %352, %v307
        %v354 = vpop.permute.xlu0 %353
        %357 = vset.pattern.permute.xlu0 0
        %358 = vperm.xlu0 %357, %v308
        %v359 = vpop.permute.xlu0 %358
        %362 = vset.pattern.permute.xlu0 0
        %363 = vperm.xlu0 %362, %v309
        %v364 = vpop.permute.xlu0 %363
        %367 = vset.pattern.permute.xlu0 0
        %368 = vperm.xlu0 %367, %v310
        %v369 = vpop.permute.xlu0 %368
        %372 = vset.pattern.permute.xlu0 0
        %373 = vperm.xlu0 %372, %v311
        %v374 = vpop.permute.xlu0 %373
        %377 = vset.pattern.permute.xlu0 0
        %378 = vperm.xlu0 %377, %v312
        %v379 = vpop.permute.xlu0 %378
        %382 = vset.pattern.permute.xlu0 0
        %383 = vperm.xlu0 %382, %v313
        %v384 = vpop.permute.xlu0 %383
        %387 = vset.pattern.permute.xlu0 0
        %388 = vperm.xlu0 %387, %v314
        %v389 = vpop.permute.xlu0 %388
        %392 = vset.pattern.permute.xlu0 0
        %393 = vperm.xlu0 %392, %v315
        %v394 = vpop.permute.xlu0 %393
        %397 = vset.pattern.permute.xlu0 0
        %398 = vperm.xlu0 %397, %v316
        %v399 = vpop.permute.xlu0 %398
        %402 = vset.pattern.permute.xlu0 0
        %403 = vperm.xlu0 %402, %v317
        %v404 = vpop.permute.xlu0 %403
        %v406 = vlaneseq
        %v407 = vshrl.u32 %v406, 7
        %v408 = vsub.s32 0, %v407
        %v409 = vrot.slane %v301, %v408
        %v410 = vmul.f32 %v329, %v409
        %v411 = vmul.f32 %v334, %v409
        %v412 = vmul.f32 %v339, %v409
        %v413 = vmul.f32 %v344, %v409
        %v414 = vmul.f32 %v349, %v409
        %v415 = vmul.f32 %v354, %v409
        %v416 = vmul.f32 %v359, %v409
        %v417 = vmul.f32 %v364, %v409
        %v418 = vmul.f32 %v369, %v409
        %v419 = vmul.f32 %v374, %v409
        %v420 = vmul.f32 %v379, %v409
        %v421 = vmul.f32 %v384, %v409
        %v422 = vmul.f32 %v389, %v409
        %v423 = vmul.f32 %v394, %v409
        %v424 = vmul.f32 %v399, %v409
        %v425 = vmul.f32 %v404, %v409
        %426 = vset.pattern.permute.xlu0 1
        %427 = vperm.xlu0 %426, %v302
        %v428 = vpop.permute.xlu0 %427
        %430 = vset.pattern.permute.xlu0 1
        %431 = vperm.xlu0 %430, %v303
        %v432 = vpop.permute.xlu0 %431
        %434 = vset.pattern.permute.xlu0 1
        %435 = vperm.xlu0 %434, %v304
        %v436 = vpop.permute.xlu0 %435
        %438 = vset.pattern.permute.xlu0 1
        %439 = vperm.xlu0 %438, %v305
        %v440 = vpop.permute.xlu0 %439
        %442 = vset.pattern.permute.xlu0 1
        %443 = vperm.xlu0 %442, %v306
        %v444 = vpop.permute.xlu0 %443
        %446 = vset.pattern.permute.xlu0 1
        %447 = vperm.xlu0 %446, %v307
        %v448 = vpop.permute.xlu0 %447
        %450 = vset.pattern.permute.xlu0 1
        %451 = vperm.xlu0 %450, %v308
        %v452 = vpop.permute.xlu0 %451
        %454 = vset.pattern.permute.xlu0 1
        %455 = vperm.xlu0 %454, %v309
        %v456 = vpop.permute.xlu0 %455
        %458 = vset.pattern.permute.xlu0 1
        %459 = vperm.xlu0 %458, %v310
        %v460 = vpop.permute.xlu0 %459
        %462 = vset.pattern.permute.xlu0 1
        %463 = vperm.xlu0 %462, %v311
        %v464 = vpop.permute.xlu0 %463
        %466 = vset.pattern.permute.xlu0 1
        %467 = vperm.xlu0 %466, %v312
        %v468 = vpop.permute.xlu0 %467
        %470 = vset.pattern.permute.xlu0 1
        %471 = vperm.xlu0 %470, %v313
        %v472 = vpop.permute.xlu0 %471
        %474 = vset.pattern.permute.xlu0 1
        %475 = vperm.xlu0 %474, %v314
        %v476 = vpop.permute.xlu0 %475
        %478 = vset.pattern.permute.xlu0 1
        %479 = vperm.xlu0 %478, %v315
        %v480 = vpop.permute.xlu0 %479
        %482 = vset.pattern.permute.xlu0 1
        %483 = vperm.xlu0 %482, %v316
        %v484 = vpop.permute.xlu0 %483
        %486 = vset.pattern.permute.xlu0 1
        %487 = vperm.xlu0 %486, %v317
        %v488 = vpop.permute.xlu0 %487
        %v490 = vlaneseq
        %v491 = vshrl.u32 %v490, 7
        %v492 = vsub.s32 1, %v491
        %v493 = vrot.slane %v301, %v492
        %v494 = vmul.f32 %v428, %v493
        %v495 = vmul.f32 %v432, %v493
        %v496 = vmul.f32 %v436, %v493
        %v497 = vmul.f32 %v440, %v493
        %v498 = vmul.f32 %v444, %v493
        %v499 = vmul.f32 %v448, %v493
        %v500 = vmul.f32 %v452, %v493
        %v501 = vmul.f32 %v456, %v493
        %v502 = vmul.f32 %v460, %v493
        %v503 = vmul.f32 %v464, %v493
        %v504 = vmul.f32 %v468, %v493
        %v505 = vmul.f32 %v472, %v493
        %v506 = vmul.f32 %v476, %v493
        %v507 = vmul.f32 %v480, %v493
        %v508 = vmul.f32 %v484, %v493
        %v509 = vmul.f32 %v488, %v493
        %v510 = vadd.f32 %v410, %v494
        %v511 = vadd.f32 %v411, %v495
        %v512 = vadd.f32 %v412, %v496
        %v513 = vadd.f32 %v413, %v497
        %v514 = vadd.f32 %v414, %v498
        %v515 = vadd.f32 %v415, %v499
        %v516 = vadd.f32 %v416, %v500
        %v517 = vadd.f32 %v417, %v501
        %v518 = vadd.f32 %v418, %v502
        %v519 = vadd.f32 %v419, %v503
        %v520 = vadd.f32 %v420, %v504
        %v521 = vadd.f32 %v421, %v505
        %v522 = vadd.f32 %v422, %v506
        %v523 = vadd.f32 %v423, %v507
        %v524 = vadd.f32 %v424, %v508
        %v525 = vadd.f32 %v425, %v509
        %526 = vset.pattern.permute.xlu0 2
        %527 = vperm.xlu0 %526, %v302
        %v528 = vpop.permute.xlu0 %527
        %530 = vset.pattern.permute.xlu0 2
        %531 = vperm.xlu0 %530, %v303
        %v532 = vpop.permute.xlu0 %531
        %534 = vset.pattern.permute.xlu0 2
        %535 = vperm.xlu0 %534, %v304
        %v536 = vpop.permute.xlu0 %535
        %538 = vset.pattern.permute.xlu0 2
        %539 = vperm.xlu0 %538, %v305
        %v540 = vpop.permute.xlu0 %539
        %542 = vset.pattern.permute.xlu0 2
        %543 = vperm.xlu0 %542, %v306
        %v544 = vpop.permute.xlu0 %543
        %546 = vset.pattern.permute.xlu0 2
        %547 = vperm.xlu0 %546, %v307
        %v548 = vpop.permute.xlu0 %547
        %550 = vset.pattern.permute.xlu0 2
        %551 = vperm.xlu0 %550, %v308
        %v552 = vpop.permute.xlu0 %551
        %554 = vset.pattern.permute.xlu0 2
        %555 = vperm.xlu0 %554, %v309
        %v556 = vpop.permute.xlu0 %555
        %558 = vset.pattern.permute.xlu0 2
        %559 = vperm.xlu0 %558, %v310
        %v560 = vpop.permute.xlu0 %559
        %562 = vset.pattern.permute.xlu0 2
        %563 = vperm.xlu0 %562, %v311
        %v564 = vpop.permute.xlu0 %563
        %566 = vset.pattern.permute.xlu0 2
        %567 = vperm.xlu0 %566, %v312
        %v568 = vpop.permute.xlu0 %567
        %570 = vset.pattern.permute.xlu0 2
        %571 = vperm.xlu0 %570, %v313
        %v572 = vpop.permute.xlu0 %571
        %574 = vset.pattern.permute.xlu0 2
        %575 = vperm.xlu0 %574, %v314
        %v576 = vpop.permute.xlu0 %575
        %578 = vset.pattern.permute.xlu0 2
        %579 = vperm.xlu0 %578, %v315
        %v580 = vpop.permute.xlu0 %579
        %582 = vset.pattern.permute.xlu0 2
        %583 = vperm.xlu0 %582, %v316
        %v584 = vpop.permute.xlu0 %583
        %586 = vset.pattern.permute.xlu0 2
        %587 = vperm.xlu0 %586, %v317
        %v588 = vpop.permute.xlu0 %587
        %v590 = vlaneseq
        %v591 = vshrl.u32 %v590, 7
        %v592 = vsub.s32 2, %v591
        %v593 = vrot.slane %v301, %v592
        %v594 = vmul.f32 %v528, %v593
        %v595 = vmul.f32 %v532, %v593
        %v596 = vmul.f32 %v536, %v593
        %v597 = vmul.f32 %v540, %v593
        %v598 = vmul.f32 %v544, %v593
        %v599 = vmul.f32 %v548, %v593
        %v600 = vmul.f32 %v552, %v593
        %v601 = vmul.f32 %v556, %v593
        %v602 = vmul.f32 %v560, %v593
        %v603 = vmul.f32 %v564, %v593
        %v604 = vmul.f32 %v568, %v593
        %v605 = vmul.f32 %v572, %v593
        %v606 = vmul.f32 %v576, %v593
        %v607 = vmul.f32 %v580, %v593
        %v608 = vmul.f32 %v584, %v593
        %v609 = vmul.f32 %v588, %v593
        %v610 = vadd.f32 %v510, %v594
        %v611 = vadd.f32 %v511, %v595
        %v612 = vadd.f32 %v512, %v596
        %v613 = vadd.f32 %v513, %v597
        %v614 = vadd.f32 %v514, %v598
        %v615 = vadd.f32 %v515, %v599
        %v616 = vadd.f32 %v516, %v600
        %v617 = vadd.f32 %v517, %v601
        %v618 = vadd.f32 %v518, %v602
        %v619 = vadd.f32 %v519, %v603
        %v620 = vadd.f32 %v520, %v604
        %v621 = vadd.f32 %v521, %v605
        %v622 = vadd.f32 %v522, %v606
        %v623 = vadd.f32 %v523, %v607
        %v624 = vadd.f32 %v524, %v608
        %v625 = vadd.f32 %v525, %v609
        %626 = vset.pattern.permute.xlu0 3
        %627 = vperm.xlu0 %626, %v302
        %v628 = vpop.permute.xlu0 %627
        %630 = vset.pattern.permute.xlu0 3
        %631 = vperm.xlu0 %630, %v303
        %v632 = vpop.permute.xlu0 %631
        %634 = vset.pattern.permute.xlu0 3
        %635 = vperm.xlu0 %634, %v304
        %v636 = vpop.permute.xlu0 %635
        %638 = vset.pattern.permute.xlu0 3
        %639 = vperm.xlu0 %638, %v305
        %v640 = vpop.permute.xlu0 %639
        %642 = vset.pattern.permute.xlu0 3
        %643 = vperm.xlu0 %642, %v306
        %v644 = vpop.permute.xlu0 %643
        %646 = vset.pattern.permute.xlu0 3
        %647 = vperm.xlu0 %646, %v307
        %v648 = vpop.permute.xlu0 %647
        %650 = vset.pattern.permute.xlu0 3
        %651 = vperm.xlu0 %650, %v308
        %v652 = vpop.permute.xlu0 %651
        %654 = vset.pattern.permute.xlu0 3
        %655 = vperm.xlu0 %654, %v309
        %v656 = vpop.permute.xlu0 %655
        %658 = vset.pattern.permute.xlu0 3
        %659 = vperm.xlu0 %658, %v310
        %v660 = vpop.permute.xlu0 %659
        %662 = vset.pattern.permute.xlu0 3
        %663 = vperm.xlu0 %662, %v311
        %v664 = vpop.permute.xlu0 %663
        %666 = vset.pattern.permute.xlu0 3
        %667 = vperm.xlu0 %666, %v312
        %v668 = vpop.permute.xlu0 %667
        %670 = vset.pattern.permute.xlu0 3
        %671 = vperm.xlu0 %670, %v313
        %v672 = vpop.permute.xlu0 %671
        %674 = vset.pattern.permute.xlu0 3
        %675 = vperm.xlu0 %674, %v314
        %v676 = vpop.permute.xlu0 %675
        %678 = vset.pattern.permute.xlu0 3
        %679 = vperm.xlu0 %678, %v315
        %v680 = vpop.permute.xlu0 %679
        %682 = vset.pattern.permute.xlu0 3
        %683 = vperm.xlu0 %682, %v316
        %v684 = vpop.permute.xlu0 %683
        %686 = vset.pattern.permute.xlu0 3
        %687 = vperm.xlu0 %686, %v317
        %v688 = vpop.permute.xlu0 %687
        %v690 = vadd.f32 %v610, %v628
        %v691 = vadd.f32 %v611, %v632
        %v692 = vadd.f32 %v612, %v636
        %v693 = vadd.f32 %v613, %v640
        %v694 = vadd.f32 %v614, %v644
        %v695 = vadd.f32 %v615, %v648
        %v696 = vadd.f32 %v616, %v652
        %v697 = vadd.f32 %v617, %v656
        %v698 = vadd.f32 %v618, %v660
        %v699 = vadd.f32 %v619, %v664
        %v700 = vadd.f32 %v620, %v668
        %v701 = vadd.f32 %v621, %v672
        %v702 = vadd.f32 %v622, %v676
        %v703 = vadd.f32 %v623, %v680
        %v704 = vadd.f32 %v624, %v684
        %v705 = vadd.f32 %v625, %v688
        %v706 = vmul.f32 %v690, 0.5
        %v707 = vmul.f32 %v691, 0.5
        %v708 = vmul.f32 %v692, 0.5
        %v709 = vmul.f32 %v693, 0.5
        %v710 = vmul.f32 %v694, 0.5
        %v711 = vmul.f32 %v695, 0.5
        %v712 = vmul.f32 %v696, 0.5
        %v713 = vmul.f32 %v697, 0.5
        %v714 = vmul.f32 %v698, 0.5
        %v715 = vmul.f32 %v699, 0.5
        %v716 = vmul.f32 %v700, 0.5
        %v717 = vmul.f32 %v701, 0.5
        %v718 = vmul.f32 %v702, 0.5
        %v719 = vmul.f32 %v703, 0.5
        %v720 = vmul.f32 %v704, 0.5
        %v721 = vmul.f32 %v705, 0.5
        %v722 = vmul.f32 %v690, 0.70710677
        %v723 = vmul.f32 %v691, 0.70710677
        %v724 = vmul.f32 %v692, 0.70710677
        %v725 = vmul.f32 %v693, 0.70710677
        %v726 = vmul.f32 %v694, 0.70710677
        %v727 = vmul.f32 %v695, 0.70710677
        %v728 = vmul.f32 %v696, 0.70710677
        %v729 = vmul.f32 %v697, 0.70710677
        %v730 = vmul.f32 %v698, 0.70710677
        %v731 = vmul.f32 %v699, 0.70710677
        %v732 = vmul.f32 %v700, 0.70710677
        %v733 = vmul.f32 %v701, 0.70710677
        %v734 = vmul.f32 %v702, 0.70710677
        %v735 = vmul.f32 %v703, 0.70710677
        %v736 = vmul.f32 %v704, 0.70710677
        %v737 = vmul.f32 %v705, 0.70710677
        %v738 = verf.f32.pop %v722
        %v739 = verf.f32.pop %v723
        %v740 = verf.f32.pop %v724
        %v741 = verf.f32.pop %v725
        %v742 = verf.f32.pop %v726
        %v743 = verf.f32.pop %v727
        %v744 = verf.f32.pop %v728
        %v745 = verf.f32.pop %v729
        %v746 = verf.f32.pop %v730
        %v747 = verf.f32.pop %v731
        %v748 = verf.f32.pop %v732
        %v749 = verf.f32.pop %v733
        %v750 = verf.f32.pop %v734
        %v751 = verf.f32.pop %v735
        %v752 = verf.f32.pop %v736
        %v753 = verf.f32.pop %v737
        %v754 = vadd.f32 %v738, 1.0
        %v755 = vadd.f32 %v739, 1.0
        %v756 = vadd.f32 %v740, 1.0
        %v757 = vadd.f32 %v741, 1.0
        %v758 = vadd.f32 %v742, 1.0
        %v759 = vadd.f32 %v743, 1.0
        %v760 = vadd.f32 %v744, 1.0
        %v761 = vadd.f32 %v745, 1.0
        %v762 = vadd.f32 %v746, 1.0
        %v763 = vadd.f32 %v747, 1.0
        %v764 = vadd.f32 %v748, 1.0
        %v765 = vadd.f32 %v749, 1.0
        %v766 = vadd.f32 %v750, 1.0
        %v767 = vadd.f32 %v751, 1.0
        %v768 = vadd.f32 %v752, 1.0
        %v769 = vadd.f32 %v753, 1.0
        %v770 = vmul.f32 %v706, %v754
        %v771 = vmul.f32 %v707, %v755
        %v772 = vmul.f32 %v708, %v756
        %v773 = vmul.f32 %v709, %v757
        %v774 = vmul.f32 %v710, %v758
        %v775 = vmul.f32 %v711, %v759
        %v776 = vmul.f32 %v712, %v760
        %v777 = vmul.f32 %v713, %v761
        %v778 = vmul.f32 %v714, %v762
        %v779 = vmul.f32 %v715, %v763
        %v780 = vmul.f32 %v716, %v764
        %v781 = vmul.f32 %v717, %v765
        %v782 = vmul.f32 %v718, %v766
        %v783 = vmul.f32 %v719, %v767
        %v784 = vmul.f32 %v720, %v768
        %v785 = vmul.f32 %v721, %v769
        %v786 = vld [vmem:[%s2] sm:$0xff]
        %v787 = vld [vmem:[%s2 + $0x8] sm:$0xff]
        %v788 = vld [vmem:[%s2 + $0x10] sm:$0xff]
        %v789 = vld [vmem:[%s2 + $0x18] sm:$0xff]
        %v790 = vld [vmem:[%s2 + $0x20] sm:$0xff]
        %v791 = vld [vmem:[%s2 + $0x28] sm:$0xff]
        %v792 = vld [vmem:[%s2 + $0x30] sm:$0xff]
        %v793 = vld [vmem:[%s2 + $0x38] sm:$0xff]
        %795 = vset.pattern.permute.xlu0 0
        %796 = vperm.xlu0 %795, %v318
        %v797 = vpop.permute.xlu0 %796
        %800 = vset.pattern.permute.xlu0 0
        %801 = vperm.xlu0 %800, %v319
        %v802 = vpop.permute.xlu0 %801
        %805 = vset.pattern.permute.xlu0 0
        %806 = vperm.xlu0 %805, %v320
        %v807 = vpop.permute.xlu0 %806
        %810 = vset.pattern.permute.xlu0 0
        %811 = vperm.xlu0 %810, %v321
        %v812 = vpop.permute.xlu0 %811
        %815 = vset.pattern.permute.xlu0 0
        %816 = vperm.xlu0 %815, %v322
        %v817 = vpop.permute.xlu0 %816
        %820 = vset.pattern.permute.xlu0 0
        %821 = vperm.xlu0 %820, %v323
        %v822 = vpop.permute.xlu0 %821
        %825 = vset.pattern.permute.xlu0 0
        %826 = vperm.xlu0 %825, %v324
        %v827 = vpop.permute.xlu0 %826
        %830 = vset.pattern.permute.xlu0 0
        %831 = vperm.xlu0 %830, %v325
        %v832 = vpop.permute.xlu0 %831
        %834 = vmatprep.subr.mxu0 0.0
        %835 = vmatpush1.msra.mxu0 %v770
        %836 = vmatprep.subr.mxu0 0.0
        %837 = vmatpush1.msra.mxu0 %v771
        %838 = vmatprep.subr.mxu0 0.0
        %839 = vmatpush1.msra.mxu0 %v772
        %840 = vmatprep.subr.mxu0 0.0
        %841 = vmatpush1.msra.mxu0 %v773
        %842 = vmatprep.subr.mxu0 0.0
        %843 = vmatpush1.msra.mxu0 %v774
        %844 = vmatprep.subr.mxu0 0.0
        %845 = vmatpush1.msra.mxu0 %v775
        %846 = vmatprep.subr.mxu0 0.0
        %847 = vmatpush1.msra.mxu0 %v776
        %848 = vmatprep.subr.mxu0 0.0
        %849 = vmatpush1.msra.mxu0 %v777
        %850 = vmatprep.subr.mxu0 0.0
        %851 = vmatpush1.msra.mxu0 %v778
        %852 = vmatprep.subr.mxu0 0.0
        %853 = vmatpush1.msra.mxu0 %v779
        %854 = vmatprep.subr.mxu0 0.0
        %855 = vmatpush1.msra.mxu0 %v780
        %856 = vmatprep.subr.mxu0 0.0
        %857 = vmatpush1.msra.mxu0 %v781
        %858 = vmatprep.subr.mxu0 0.0
        %859 = vmatpush1.msra.mxu0 %v782
        %860 = vmatprep.subr.mxu0 0.0
        %861 = vmatpush1.msra.mxu0 %v783
        %862 = vmatprep.subr.mxu0 0.0
        %863 = vmatpush1.msra.mxu0 %v784
        %864 = vmatprep.subr.mxu0 0.0
        %865 = vmatpush1.msra.mxu0 %v785
        %866 = vmatprep.subr.mxu0 0.0
        %867 = vmatpush1.msra.mxu0 0.0
        %868 = vmatprep.subr.mxu0 0.0
        %869 = vmatpush1.msra.mxu0 0.0
        %870 = vmatprep.subr.mxu0 0.0
        %871 = vmatpush1.msra.mxu0 0.0
        %872 = vmatprep.subr.mxu0 0.0
        %873 = vmatpush1.msra.mxu0 0.0
        %874 = vmatprep.subr.mxu0 0.0
        %875 = vmatpush1.msra.mxu0 0.0
        %876 = vmatprep.subr.mxu0 0.0
        %877 = vmatpush1.msra.mxu0 0.0
        %878 = vmatprep.subr.mxu0 0.0
        %879 = vmatpush1.msra.mxu0 0.0
        %880 = vmatprep.subr.mxu0 0.0
        %881 = vmatpush1.msra.mxu0 0.0
        %882 = vmatprep.subr.mxu0 0.0
        %883 = vmatpush1.msra.mxu0 0.0
        %884 = vmatprep.subr.mxu0 0.0
        %885 = vmatpush1.msra.mxu0 0.0
        %886 = vmatprep.subr.mxu0 0.0
        %887 = vmatpush1.msra.mxu0 0.0
        %888 = vmatprep.subr.mxu0 0.0
        %889 = vmatpush1.msra.mxu0 0.0
        %890 = vmatprep.subr.mxu0 0.0
        %891 = vmatpush1.msra.mxu0 0.0
        %892 = vmatprep.subr.mxu0 0.0
        %893 = vmatpush1.msra.mxu0 0.0
        %894 = vmatprep.subr.mxu0 0.0
        %895 = vmatpush1.msra.mxu0 0.0
        %896 = vmatprep.subr.mxu0 0.0
        %897 = vmatpush1.msra.mxu0 0.0
        %898 = vmatprep.mubr.f32.mxu0 0.0
        %899 = vmatmul.mubr.f32.gmra.mrb[0].mxu0 %v786
        %v900 = vpop.f32.mrb[0].mxu0
        %v901 = vadd.f32 %v797, %v900
        %v902 = vpop.f32.mrb[0].mxu0
        %903 = vmatprep.mubr.f32.mxu0 0.0
        %904 = vmatmul.mubr.f32.gmra.mrb[0].mxu0 %v787
        %v905 = vpop.f32.mrb[0].mxu0
        %v906 = vadd.f32 %v802, %v905
        %v907 = vpop.f32.mrb[0].mxu0
        %908 = vmatprep.mubr.f32.mxu0 0.0
        %909 = vmatmul.mubr.f32.gmra.mrb[0].mxu0 %v788
        %v910 = vpop.f32.mrb[0].mxu0
        %v911 = vadd.f32 %v807, %v910
        %v912 = vpop.f32.mrb[0].mxu0
        %913 = vmatprep.mubr.f32.mxu0 0.0
        %914 = vmatmul.mubr.f32.gmra.mrb[0].mxu0 %v789
        %v915 = vpop.f32.mrb[0].mxu0
        %v916 = vadd.f32 %v812, %v915
        %v917 = vpop.f32.mrb[0].mxu0
        %918 = vmatprep.mubr.f32.mxu0 0.0
        %919 = vmatmul.mubr.f32.gmra.mrb[0].mxu0 %v790
        %v920 = vpop.f32.mrb[0].mxu0
        %v921 = vadd.f32 %v817, %v920
        %v922 = vpop.f32.mrb[0].mxu0
        %923 = vmatprep.mubr.f32.mxu0 0.0
        %924 = vmatmul.mubr.f32.gmra.mrb[0].mxu0 %v791
        %v925 = vpop.f32.mrb[0].mxu0
        %v926 = vadd.f32 %v822, %v925
        %v927 = vpop.f32.mrb[0].mxu0
        %928 = vmatprep.mubr.f32.mxu0 0.0
        %929 = vmatmul.mubr.f32.gmra.mrb[0].mxu0 %v792
        %v930 = vpop.f32.mrb[0].mxu0
        %v931 = vadd.f32 %v827, %v930
        %v932 = vpop.f32.mrb[0].mxu0
        %933 = vmatprep.mubr.f32.mxu0 0.0
        %934 = vmatmul.mubr.f32.gmra.mrb[0].mxu0 %v793
        %v935 = vpop.f32.mrb[0].mxu0
        %v936 = vadd.f32 %v832, %v935
        %v937 = vpop.f32.mrb[0].mxu0
        %938 = vdwg.mxu0
        %v939 = vmul.f32 %v901, 0.5
        %v940 = vmul.f32 %v906, 0.5
        %v941 = vmul.f32 %v911, 0.5
        %v942 = vmul.f32 %v916, 0.5
        %v943 = vmul.f32 %v921, 0.5
        %v944 = vmul.f32 %v926, 0.5
        %v945 = vmul.f32 %v931, 0.5
        %v946 = vmul.f32 %v936, 0.5
        %v947 = vmul.f32 %v901, 0.70710677
        %v948 = vmul.f32 %v906, 0.70710677
        %v949 = vmul.f32 %v911, 0.70710677
        %v950 = vmul.f32 %v916, 0.70710677
        %v951 = vmul.f32 %v921, 0.70710677
        %v952 = vmul.f32 %v926, 0.70710677
        %v953 = vmul.f32 %v931, 0.70710677
        %v954 = vmul.f32 %v936, 0.70710677
        %v955 = verf.f32.pop %v947
        %v956 = verf.f32.pop %v948
        %v957 = verf.f32.pop %v949
        %v958 = verf.f32.pop %v950
        %v959 = verf.f32.pop %v951
        %v960 = verf.f32.pop %v952
        %v961 = verf.f32.pop %v953
        %v962 = verf.f32.pop %v954
        %v963 = vadd.f32 %v955, 1.0
        %v964 = vadd.f32 %v956, 1.0
        %v965 = vadd.f32 %v957, 1.0
        %v966 = vadd.f32 %v958, 1.0
        %v967 = vadd.f32 %v959, 1.0
        %v968 = vadd.f32 %v960, 1.0
        %v969 = vadd.f32 %v961, 1.0
        %v970 = vadd.f32 %v962, 1.0
        %v971 = vmul.f32 %v939, %v963
        %v972 = vmul.f32 %v940, %v964
        %v973 = vmul.f32 %v941, %v965
        %v974 = vmul.f32 %v942, %v966
        %v975 = vmul.f32 %v943, %v967
        %v976 = vmul.f32 %v944, %v968
        %v977 = vmul.f32 %v945, %v969
        %v978 = vmul.f32 %v946, %v970
        %v979 = vld [vmem:[%s3] sm:$0xff]
        %v980 = vld [vmem:[%s3 + $0x8] sm:$0xff]
        %v981 = vld [vmem:[%s3 + $0x10] sm:$0xff]
        %v982 = vld [vmem:[%s3 + $0x18] sm:$0xff]
        %983 = vset.pattern.permute.xlu0 1
        %984 = vperm.xlu0 %983, %v318
        %v985 = vpop.permute.xlu0 %984
        %987 = vset.pattern.permute.xlu0 1
        %988 = vperm.xlu0 %987, %v319
        %v989 = vpop.permute.xlu0 %988
        %991 = vset.pattern.permute.xlu0 1
        %992 = vperm.xlu0 %991, %v320
        %v993 = vpop.permute.xlu0 %992
        %995 = vset.pattern.permute.xlu0 1
        %996 = vperm.xlu0 %995, %v321
        %v997 = vpop.permute.xlu0 %996
        %vm999 = vcmask 523264
        %v1001 = vsel %vm999, %v979, 0
        %v1004 = vsel %vm999, %v980, 0
        %v1007 = vsel %vm999, %v981, 0
        %v1010 = vsel %vm999, %v982, 0
        %1012 = vmatprep.subr.mxu0 0.0
        %1013 = vmatpush1.msra.mxu0 %v971
        %1014 = vmatprep.subr.mxu0 0.0
        %1015 = vmatpush1.msra.mxu0 %v972
        %1016 = vmatprep.subr.mxu0 0.0
        %1017 = vmatpush1.msra.mxu0 %v973
        %1018 = vmatprep.subr.mxu0 0.0
        %1019 = vmatpush1.msra.mxu0 %v974
        %1020 = vmatprep.subr.mxu0 0.0
        %1021 = vmatpush1.msra.mxu0 %v975
        %1022 = vmatprep.subr.mxu0 0.0
        %1023 = vmatpush1.msra.mxu0 %v976
        %1024 = vmatprep.subr.mxu0 0.0
        %1025 = vmatpush1.msra.mxu0 %v977
        %1026 = vmatprep.subr.mxu0 0.0
        %1027 = vmatpush1.msra.mxu0 %v978
        %1028 = vmatprep.subr.mxu0 0.0
        %1029 = vmatpush1.msra.mxu0 0.0
        %1030 = vmatprep.subr.mxu0 0.0
        %1031 = vmatpush1.msra.mxu0 0.0
        %1032 = vmatprep.subr.mxu0 0.0
        %1033 = vmatpush1.msra.mxu0 0.0
        %1034 = vmatprep.subr.mxu0 0.0
        %1035 = vmatpush1.msra.mxu0 0.0
        %1036 = vmatprep.subr.mxu0 0.0
        %1037 = vmatpush1.msra.mxu0 0.0
        %1038 = vmatprep.subr.mxu0 0.0
        %1039 = vmatpush1.msra.mxu0 0.0
        %1040 = vmatprep.subr.mxu0 0.0
        %1041 = vmatpush1.msra.mxu0 0.0
        %1042 = vmatprep.subr.mxu0 0.0
        %1043 = vmatpush1.msra.mxu0 0.0
        %1044 = vmatprep.subr.mxu0 0.0
        %1045 = vmatpush1.msra.mxu0 0.0
        %1046 = vmatprep.subr.mxu0 0.0
        %1047 = vmatpush1.msra.mxu0 0.0
        %1048 = vmatprep.subr.mxu0 0.0
        %1049 = vmatpush1.msra.mxu0 0.0
        %1050 = vmatprep.subr.mxu0 0.0
        %1051 = vmatpush1.msra.mxu0 0.0
        %1052 = vmatprep.subr.mxu0 0.0
        %1053 = vmatpush1.msra.mxu0 0.0
        %1054 = vmatprep.subr.mxu0 0.0
        %1055 = vmatpush1.msra.mxu0 0.0
        %1056 = vmatprep.subr.mxu0 0.0
        %1057 = vmatpush1.msra.mxu0 0.0
        %1058 = vmatprep.subr.mxu0 0.0
        %1059 = vmatpush1.msra.mxu0 0.0
        %1060 = vmatprep.subr.mxu0 0.0
        %1061 = vmatpush1.msra.mxu0 0.0
        %1062 = vmatprep.subr.mxu0 0.0
        %1063 = vmatpush1.msra.mxu0 0.0
        %1064 = vmatprep.subr.mxu0 0.0
        %1065 = vmatpush1.msra.mxu0 0.0
        %1066 = vmatprep.subr.mxu0 0.0
        %1067 = vmatpush1.msra.mxu0 0.0
        %1068 = vmatprep.subr.mxu0 0.0
        %1069 = vmatpush1.msra.mxu0 0.0
        %1070 = vmatprep.subr.mxu0 0.0
        %1071 = vmatpush1.msra.mxu0 0.0
        %1072 = vmatprep.subr.mxu0 0.0
        %1073 = vmatpush1.msra.mxu0 0.0
        %1074 = vmatprep.subr.mxu0 0.0
        %1075 = vmatpush1.msra.mxu0 0.0
        %1076 = vmatprep.mubr.f32.mxu0 0.0
        %1077 = vmatmul.mubr.f32.gmra.mrb[0].mxu0 %v1001
        %v1078 = vpop.f32.mrb[0].mxu0
        %v1079 = vadd.f32 %v985, %v1078
        %v1080 = vpop.f32.mrb[0].mxu0
        %1081 = vmatprep.mubr.f32.mxu0 0.0
        %1082 = vmatmul.mubr.f32.gmra.mrb[0].mxu0 %v1004
        %v1083 = vpop.f32.mrb[0].mxu0
        %v1084 = vadd.f32 %v989, %v1083
        %v1085 = vpop.f32.mrb[0].mxu0
        %1086 = vmatprep.mubr.f32.mxu0 0.0
        %1087 = vmatmul.mubr.f32.gmra.mrb[0].mxu0 %v1007
        %v1088 = vpop.f32.mrb[0].mxu0
        %v1089 = vadd.f32 %v993, %v1088
        %v1090 = vpop.f32.mrb[0].mxu0
        %1091 = vmatprep.mubr.f32.mxu0 0.0
        %1092 = vmatmul.mubr.f32.gmra.mrb[0].mxu0 %v1010
        %v1093 = vpop.f32.mrb[0].mxu0
        %v1094 = vadd.f32 %v997, %v1093
        %v1095 = vpop.f32.mrb[0].mxu0
        %1096 = vdwg.mxu0
        %v1097 = vmul.f32 %v1079, 0.5
        %v1098 = vmul.f32 %v1084, 0.5
        %v1099 = vmul.f32 %v1089, 0.5
        %v1100 = vmul.f32 %v1094, 0.5
        %v1101 = vmul.f32 %v1079, 0.70710677
        %v1102 = vmul.f32 %v1084, 0.70710677
        %v1103 = vmul.f32 %v1089, 0.70710677
        %v1104 = vmul.f32 %v1094, 0.70710677
        %v1105 = verf.f32.pop %v1101
        %v1106 = verf.f32.pop %v1102
        %v1107 = verf.f32.pop %v1103
        %v1108 = verf.f32.pop %v1104
        %v1109 = vadd.f32 %v1105, 1.0
        %v1110 = vadd.f32 %v1106, 1.0
        %v1111 = vadd.f32 %v1107, 1.0
        %v1112 = vadd.f32 %v1108, 1.0
        %v1113 = vmul.f32 %v1097, %v1109
        %v1114 = vmul.f32 %v1098, %v1110
        %v1115 = vmul.f32 %v1099, %v1111
        %v1116 = vmul.f32 %v1100, %v1112
        %v1117 = vld [vmem:[%s4] sm:$0xff]
        %v1118 = vld [vmem:[%s4 + $0x8] sm:$0xff]
        %1119 = vset.pattern.permute.xlu0 2
        %1120 = vperm.xlu0 %1119, %v318
        %v1121 = vpop.permute.xlu0 %1120
        %1123 = vset.pattern.permute.xlu0 2
        %1124 = vperm.xlu0 %1123, %v319
        %v1125 = vpop.permute.xlu0 %1124
        %vm1127 = vcmask 261120
        %v1129 = vsel %vm1127, %v1117, 0
        %v1132 = vsel %vm1127, %v1118, 0
        %1134 = vmatprep.subr.mxu0 0.0
        %1135 = vmatpush1.msra.mxu0 %v1113
        %1136 = vmatprep.subr.mxu0 0.0
        %1137 = vmatpush1.msra.mxu0 %v1114
        %1138 = vmatprep.subr.mxu0 0.0
        %1139 = vmatpush1.msra.mxu0 %v1115
        %1140 = vmatprep.subr.mxu0 0.0
        %1141 = vmatpush1.msra.mxu0 %v1116
        %1142 = vmatprep.subr.mxu0 0.0
        %1143 = vmatpush1.msra.mxu0 0.0
        %1144 = vmatprep.subr.mxu0 0.0
        %1145 = vmatpush1.msra.mxu0 0.0
        %1146 = vmatprep.subr.mxu0 0.0
        %1147 = vmatpush1.msra.mxu0 0.0
        %1148 = vmatprep.subr.mxu0 0.0
        %1149 = vmatpush1.msra.mxu0 0.0
        %1150 = vmatprep.subr.mxu0 0.0
        %1151 = vmatpush1.msra.mxu0 0.0
        %1152 = vmatprep.subr.mxu0 0.0
        %1153 = vmatpush1.msra.mxu0 0.0
        %1154 = vmatprep.subr.mxu0 0.0
        %1155 = vmatpush1.msra.mxu0 0.0
        %1156 = vmatprep.subr.mxu0 0.0
        %1157 = vmatpush1.msra.mxu0 0.0
        %1158 = vmatprep.subr.mxu0 0.0
        %1159 = vmatpush1.msra.mxu0 0.0
        %1160 = vmatprep.subr.mxu0 0.0
        %1161 = vmatpush1.msra.mxu0 0.0
        %1162 = vmatprep.subr.mxu0 0.0
        %1163 = vmatpush1.msra.mxu0 0.0
        %1164 = vmatprep.subr.mxu0 0.0
        %1165 = vmatpush1.msra.mxu0 0.0
        %1166 = vmatprep.subr.mxu0 0.0
        %1167 = vmatpush1.msra.mxu0 0.0
        %1168 = vmatprep.subr.mxu0 0.0
        %1169 = vmatpush1.msra.mxu0 0.0
        %1170 = vmatprep.subr.mxu0 0.0
        %1171 = vmatpush1.msra.mxu0 0.0
        %1172 = vmatprep.subr.mxu0 0.0
        %1173 = vmatpush1.msra.mxu0 0.0
        %1174 = vmatprep.subr.mxu0 0.0
        %1175 = vmatpush1.msra.mxu0 0.0
        %1176 = vmatprep.subr.mxu0 0.0
        %1177 = vmatpush1.msra.mxu0 0.0
        %1178 = vmatprep.subr.mxu0 0.0
        %1179 = vmatpush1.msra.mxu0 0.0
        %1180 = vmatprep.subr.mxu0 0.0
        %1181 = vmatpush1.msra.mxu0 0.0
        %1182 = vmatprep.subr.mxu0 0.0
        %1183 = vmatpush1.msra.mxu0 0.0
        %1184 = vmatprep.subr.mxu0 0.0
        %1185 = vmatpush1.msra.mxu0 0.0
        %1186 = vmatprep.subr.mxu0 0.0
        %1187 = vmatpush1.msra.mxu0 0.0
        %1188 = vmatprep.subr.mxu0 0.0
        %1189 = vmatpush1.msra.mxu0 0.0
        %1190 = vmatprep.subr.mxu0 0.0
        %1191 = vmatpush1.msra.mxu0 0.0
        %1192 = vmatprep.subr.mxu0 0.0
        %1193 = vmatpush1.msra.mxu0 0.0
        %1194 = vmatprep.subr.mxu0 0.0
        %1195 = vmatpush1.msra.mxu0 0.0
        %1196 = vmatprep.subr.mxu0 0.0
        %1197 = vmatpush1.msra.mxu0 0.0
        %1198 = vmatprep.mubr.f32.mxu0 0.0
        %1199 = vmatmul.mubr.f32.gmra.mrb[0].mxu0 %v1129
        %v1200 = vpop.f32.mrb[0].mxu0
        %v1201 = vadd.f32 %v1121, %v1200
        %v1202 = vpop.f32.mrb[0].mxu0
        %1203 = vmatprep.mubr.f32.mxu0 0.0
        %1204 = vmatmul.mubr.f32.gmra.mrb[0].mxu0 %v1132
        %v1205 = vpop.f32.mrb[0].mxu0
        %v1206 = vadd.f32 %v1125, %v1205
        %v1207 = vpop.f32.mrb[0].mxu0
        %1208 = vdwg.mxu0
        %v1209 = vmul.f32 %v1201, 0.5
        %v1210 = vmul.f32 %v1206, 0.5
        %v1211 = vmul.f32 %v1201, 0.70710677
        %v1212 = vmul.f32 %v1206, 0.70710677
        %v1213 = verf.f32.pop %v1211
        %v1214 = verf.f32.pop %v1212
        %v1215 = vadd.f32 %v1213, 1.0
        %v1216 = vadd.f32 %v1214, 1.0
        %v1217 = vmul.f32 %v1209, %v1215
        %v1218 = vmul.f32 %v1210, %v1216
        %v1219 = vld [vmem:[%s5] sm:$0x1]
        %s1220 = sld [smem:[#allocation2]]
        %v1221 = vstv %s1220
        %vm1222 = vcmask 130048
        %v1224 = vsel %vm1222, %v1219, 0
        %1226 = vmatprep.subr.mxu0 0.0
        %1227 = vmatpush1.msra.mxu0 %v1217
        %1228 = vmatprep.subr.mxu0 0.0
        %1229 = vmatpush1.msra.mxu0 %v1218
        %1230 = vmatprep.subr.mxu0 0.0
        %1231 = vmatpush1.msra.mxu0 0.0
        %1232 = vmatprep.subr.mxu0 0.0
        %1233 = vmatpush1.msra.mxu0 0.0
        %1234 = vmatprep.subr.mxu0 0.0
        %1235 = vmatpush1.msra.mxu0 0.0
        %1236 = vmatprep.subr.mxu0 0.0
        %1237 = vmatpush1.msra.mxu0 0.0
        %1238 = vmatprep.subr.mxu0 0.0
        %1239 = vmatpush1.msra.mxu0 0.0
        %1240 = vmatprep.subr.mxu0 0.0
        %1241 = vmatpush1.msra.mxu0 0.0
        %1242 = vmatprep.subr.mxu0 0.0
        %1243 = vmatpush1.msra.mxu0 0.0
        %1244 = vmatprep.subr.mxu0 0.0
        %1245 = vmatpush1.msra.mxu0 0.0
        %1246 = vmatprep.subr.mxu0 0.0
        %1247 = vmatpush1.msra.mxu0 0.0
        %1248 = vmatprep.subr.mxu0 0.0
        %1249 = vmatpush1.msra.mxu0 0.0
        %1250 = vmatprep.subr.mxu0 0.0
        %1251 = vmatpush1.msra.mxu0 0.0
        %1252 = vmatprep.subr.mxu0 0.0
        %1253 = vmatpush1.msra.mxu0 0.0
        %1254 = vmatprep.subr.mxu0 0.0
        %1255 = vmatpush1.msra.mxu0 0.0
        %1256 = vmatprep.subr.mxu0 0.0
        %1257 = vmatpush1.msra.mxu0 0.0
        %1258 = vmatprep.subr.mxu0 0.0
        %1259 = vmatpush1.msra.mxu0 0.0
        %1260 = vmatprep.subr.mxu0 0.0
        %1261 = vmatpush1.msra.mxu0 0.0
        %1262 = vmatprep.subr.mxu0 0.0
        %1263 = vmatpush1.msra.mxu0 0.0
        %1264 = vmatprep.subr.mxu0 0.0
        %1265 = vmatpush1.msra.mxu0 0.0
        %1266 = vmatprep.subr.mxu0 0.0
        %1267 = vmatpush1.msra.mxu0 0.0
        %1268 = vmatprep.subr.mxu0 0.0
        %1269 = vmatpush1.msra.mxu0 0.0
        %1270 = vmatprep.subr.mxu0 0.0
        %1271 = vmatpush1.msra.mxu0 0.0
        %1272 = vmatprep.subr.mxu0 0.0
        %1273 = vmatpush1.msra.mxu0 0.0
        %1274 = vmatprep.subr.mxu0 0.0
        %1275 = vmatpush1.msra.mxu0 0.0
        %1276 = vmatprep.subr.mxu0 0.0
        %1277 = vmatpush1.msra.mxu0 0.0
        %1278 = vmatprep.subr.mxu0 0.0
        %1279 = vmatpush1.msra.mxu0 0.0
        %1280 = vmatprep.subr.mxu0 0.0
        %1281 = vmatpush1.msra.mxu0 0.0
        %1282 = vmatprep.subr.mxu0 0.0
        %1283 = vmatpush1.msra.mxu0 0.0
        %1284 = vmatprep.subr.mxu0 0.0
        %1285 = vmatpush1.msra.mxu0 0.0
        %1286 = vmatprep.subr.mxu0 0.0
        %1287 = vmatpush1.msra.mxu0 0.0
        %1288 = vmatprep.subr.mxu0 0.0
        %1289 = vmatpush1.msra.mxu0 0.0
        %1290 = vmatprep.mubr.f32.mxu0 0.0
        %1291 = vmatmul.mubr.f32.gmra.mrb[0].mxu0 %v1224
        %v1292 = vpop.f32.mrb[0].mxu0
        %v1293 = vadd.f32 %v1221, %v1292
        %v1294 = vpop.f32.mrb[0].mxu0
        %1295 = vdwg.mxu0
        %1296 = vst [vmem:[%s296] sm:$0x1] %v1293
        %s1297 = sand.u32 %s204, 1
        %s1298 = scalar_lea.sflag [#allocation4], %s1297
        %s1299 = sand.u32 %s204, 1
        %s1300 = scalar_lea.vmem [#allocation3], %s1299
        // Predicated region
        $region53: #{mlp_forward.1} parent=51 // pred_check
          %p1301 = pneg %p214
        $region54: #{mlp_forward.1} parent=51 // pred_check_branch
          %1303 = sbr.rel (%p1301) target = $region56
        $region55: #{mlp_forward.1} parent=51 // pred_region
          %s1305 = ssub.s32 16, 16
          %1306 = vsyncadd %s1298, %s1305
          %s1307 = smul.addr %s23, 16
          %s1308 = scalar_lea.hbm %s8, %s1307
          %s1310 = sshll.u32 %s1300, 4
          %s1311 = int_to_ptr.vmem [resolvable:$true] %s1310
          %1313 = dma.vmem_to_hbm [thread:$0]  %s1311, 16, %s1308, %s1298
        $region56: #{mlp_forward.1} parent=51 // pred_fallthru
          _
      $region52: #{mlp_forward.1} parent=5 // pred_fallthru
        _
      %p1314 = scmp.le.s32.totalorder 2, %s18
      // Predicated region
      $region57: #{mlp_forward.1} parent=5 // pred_check
        %p1315 = pneg %p1314
      $region58: #{mlp_forward.1} parent=5 // pred_check_branch
        %1317 = sbr.rel (%p1315) target = $region60
      $region59: #{mlp_forward.1} parent=5 // pred_region
        %s1318 = ssub.s32 %s18, 2
        // Predicated region
        $region61: #{mlp_forward.1} parent=59 // pred_check
          %p1319 = pneg %p220
        $region62: #{mlp_forward.1} parent=59 // pred_check_branch
          %1321 = sbr.rel (%p1319) target = $region64
        $region63: #{mlp_forward.1} parent=59 // pred_region
          %s1322 = sand.u32 %s205, 1
          %s1323 = scalar_lea.sflag [#allocation4], %s1322
          %s1324 = sand.u32 %s205, 1
          %s1325 = scalar_lea.vmem [#allocation3], %s1324
          %1326 = dma.done %s1323, 16
        $region64: #{mlp_forward.1} parent=59 // pred_fallthru
          _
      $region60: #{mlp_forward.1} parent=5 // pred_fallthru
        _
    $region6: #{mlp_forward.1} parent=1 // loop_footer
      %s22 = sadd.s32 1, %s18
    $region7: #{mlp_forward.1} parent=1 // loop_footer_branch
      %17 = sbr.rel target = $region3
    $region8: #{mlp_forward.1} parent=1 // loop_exit
      _
    %1327 = vsyncpa [#allocation4], 1
    %s1328 = scalar_lea.sflag [#allocation4], 1
    %1329 = vsyncpa %s1328, 1

</llo_original>
